<compile_context>
chip_gen: v7x
topology: tpu7x:2x2x1
jax: 0.10.0
libtpu: 0.0.40
codegen_flags: <defaults>
</compile_context>

<pallas_src>
import functools

import jax
import jax.numpy as jnp
from jax.experimental import pallas as pl
from jax.experimental.pallas import tpu as pltpu


def _vmem_budgets():
    """(data_budget_bytes, vmem_limit_bytes, buffer_depth) per TPU generation."""
    try:
        cap = pltpu.get_tpu_info().vmem_capacity_bytes
    except Exception:
        cap = 128 * 1024 * 1024
    if cap <= 80 * 1024 * 1024:
        # v7x-class: 64 MiB per TensorCore -> leave headroom for compiler scratch.
        return 20 * 1024 * 1024, 40 * 1024 * 1024, 2
    # v5e / v6e: 128 MiB VMEM -> larger slabs and deeper buffering are safe.
    return 36 * 1024 * 1024, 64 * 1024 * 1024, 3


def _choose_batch_tile(B, per_elem_bytes, per_elem_f32_bytes, data_budget,
                       total_buf_count, min_steps=8, min_slab_bytes=1 << 20):
    """How many batch elements to process per grid step.

    per_elem_bytes:     one batch element's x slab (single buffer, x dtype).
    per_elem_f32_bytes: conservative allowance for the f32 reduce temporary.
    total_buf_count:    (#input buffers + #output buffers) for the x/out specs.
    """
    per_elem_total = total_buf_count * per_elem_bytes + per_elem_f32_bytes
    tb = max(1, min(B, data_budget // max(per_elem_total, 1)))

    # Prefer >= min_steps pipelined grid steps so DMA-in / compute / DMA-out
    # overlap, as long as each step's input slab stays >= ~1 MiB (streaming
    # kernels hit ~85% of HBM roofline already at ~1 MiB tiles; per-step
    # overhead is only ~0.35 us).
    tb_for_steps = max(1, pl.cdiv(B, min_steps))
    tb_min_slab = max(1, min_slab_bytes // max(per_elem_bytes, 1))
    tb = min(tb, max(min(tb_min_slab, B), tb_for_steps))

    # Always keep >= 2 grid steps when B >= 2 so both v7x TensorCores get work.
    if B >= 2 and tb >= B:
        tb = pl.cdiv(B, 2)

    # Keep all blocks full-sized (TB must divide B).
    while B % tb != 0:
        tb -= 1
    return tb


def _se_kernel(x_ref, w1_ref, w2_ref, b_ref, o_ref, *, channels_last):
    # channels_last=False: x_ref/o_ref are (TB, C, HW)
    # channels_last=True : x_ref/o_ref are (TB, HW, C)
    # w1_ref: (C, Cr)  fc1 weight, pre-transposed to (in, out), f32
    # w2_ref: (Cr, C)  fc2 weight, pre-transposed to (in, out), f32
    # b_ref:  (2, C)   row 0 = fc1 bias (zero-padded to C), row 1 = fc2 bias
    cr = w1_ref.shape[1]
    xb = x_ref[...]                                    # input dtype, no f32 copy kept live

    # ---- Squeeze: global average pool (cast fused into the f32 reduce) ----
    if channels_last:
        hw = x_ref.shape[1]
        m = jnp.sum(xb.astype(jnp.float32), axis=1) * (1.0 / hw)   # (TB, C)
    else:
        hw = x_ref.shape[2]
        m = jnp.sum(xb.astype(jnp.float32), axis=2) * (1.0 / hw)   # (TB, C)

    # ---- Excitation: FC1 -> ReLU -> FC2 -> clamp (all f32) ----------------
    b1 = b_ref[0:1, :cr]                               # (1, Cr)
    b2 = b_ref[1:2, :]                                 # (1, C)
    h = jnp.dot(m, w1_ref[...], preferred_element_type=jnp.float32) + b1
    h = jnp.maximum(h, 0.0)                            # (TB, Cr)
    s = jnp.dot(h, w2_ref[...], preferred_element_type=jnp.float32) + b2
    s = jnp.clip(s, 0.0, 1.0)                          # (TB, C)

    # ---- Scale: broadcast the per-(batch, channel) gate --------------------
    # Multiply in x.dtype (gate cast down) so no full-tile f32 product is
    # materialized; exact for f32 inputs.
    g = s.astype(xb.dtype)
    if channels_last:
        o_ref[...] = (xb * g[:, None, :]).astype(o_ref.dtype)
    else:
        o_ref[...] = (xb * g[:, :, None]).astype(o_ref.dtype)


def prepare_se_params(fc1_w, fc1_b, fc2_w, fc2_b):
    """One-time parameter prep (cache the result across forward calls).

    PyTorch nn.Linear convention: fc1_w (Cr, C), fc1_b (Cr,),
    fc2_w (C, Cr), fc2_b (C,).
    """
    Cr, C = fc1_w.shape
    w1_t = fc1_w.astype(jnp.float32).T                 # (C, Cr)
    w2_t = fc2_w.astype(jnp.float32).T                 # (Cr, C)
    bias = jnp.stack(
        [jnp.pad(fc1_b.astype(jnp.float32), (0, C - Cr)),
         fc2_b.astype(jnp.float32)],
        axis=0)                                        # (2, C), no scatters
    return w1_t, w2_t, bias


def se_layer_prepared(x, w1_t, w2_t, bias):
    B, C, H, W = x.shape
    HW = H * W
    Cr = w1_t.shape[1]
    dtype = x.dtype

    # Layout: keep the fast (lane) axis a multiple of 128 when possible.
    channels_last = (HW % 128 != 0) and (C % 128 == 0)
    if channels_last:
        x_flat = x.reshape(B, C, HW).transpose(0, 2, 1)      # (B, HW, C)
    else:
        x_flat = x.reshape(B, C, HW)                         # (B, C, HW)

    data_budget, vmem_limit, depth = _vmem_budgets()
    per_elem = C * HW * dtype.itemsize
    per_elem_f32 = C * HW * 4
    TB = _choose_batch_tile(B, per_elem, per_elem_f32, data_budget, 2 * depth)
    steps = B // TB
    # Deeper buffering only when there are enough grid steps to use it.
    depth = depth if (depth > 2 and steps >= depth) else 2

    blk = (TB, HW, C) if channels_last else (TB, C, HW)
    imap = lambda i: (i, 0, 0)
    x_spec_kwargs = {"pipeline_mode": pl.Buffered(depth)} if depth != 2 else {}

    out_flat = pl.pallas_call(
        functools.partial(_se_kernel, channels_last=channels_last),
        out_shape=jax.ShapeDtypeStruct(x_flat.shape, dtype),
        grid_spec=pltpu.PrefetchScalarGridSpec(
            num_scalar_prefetch=0,
            grid=(steps,),
            in_specs=[
                pl.BlockSpec(blk, imap, **x_spec_kwargs),     # x batch tile
                pl.BlockSpec((C, Cr), lambda i: (0, 0)),      # fc1 weight^T
                pl.BlockSpec((Cr, C), lambda i: (0, 0)),      # fc2 weight^T
                pl.BlockSpec((2, C), lambda i: (0, 0)),       # biases
            ],
            out_specs=pl.BlockSpec(blk, imap, **x_spec_kwargs),
        ),
        compiler_params=pltpu.CompilerParams(
            dimension_semantics=("parallel",),
            vmem_limit_bytes=vmem_limit,
        ),
    )(x_flat, w1_t, w2_t, bias)

    if channels_last:
        return out_flat.transpose(0, 2, 1).reshape(B, C, H, W)
    return out_flat.reshape(B, C, H, W)


def se_layer(x, fc1_w, fc1_b, fc2_w, fc2_b):
    """Squeeze-and-Excitation forward. Output dtype matches x.dtype."""
    return se_layer_prepared(x, *prepare_se_params(fc1_w, fc1_b, fc2_w, fc2_b))


def _reference(x, fc1_w, fc1_b, fc2_w, fc2_b):
    # Pure-JAX reference mirroring the PyTorch forward (f32 gate math).
    hi = jax.lax.Precision.HIGHEST
    y = jnp.mean(x.astype(jnp.float32), axis=(2, 3))                 # (B, C)
    y = jnp.maximum(jnp.dot(y, fc1_w.T, precision=hi) + fc1_b, 0.0)  # (B, Cr)
    y = jnp.dot(y, fc2_w.T, precision=hi) + fc2_b                    # (B, C)
    y = jnp.clip(y, 0.0, 1.0)
    return (x.astype(jnp.float32) * y[:, :, None, None]).astype(x.dtype)


if __name__ == "__main__":
    key = jax.random.PRNGKey(0)
    kx1, kp1, kx2, kp2 = jax.random.split(key, 4)

    def make_params(k, C, reduction=4):
        Cr = max(1, C // reduction)
        k1w, k1b, k2w, k2b = jax.random.split(k, 4)
        fc1_w = jax.random.normal(k1w, (Cr, C), dtype=jnp.float32) * 0.5
        fc1_b = jax.random.normal(k1b, (Cr,), dtype=jnp.float32) * 0.1
        fc2_w = jax.random.normal(k2w, (C, Cr), dtype=jnp.float32) * 0.5
        fc2_b = jax.random.normal(k2b, (C,), dtype=jnp.float32) * 0.1
        return fc1_w, fc1_b, fc2_w, fc2_b

    se_fn = jax.jit(se_layer)

    # ---- Test 1: channels-first lane-dense path (HW = 256, multiple of 128) ----
    B, C, H, W = 2, 4, 16, 16
    x1 = jax.random.normal(kx1, (B, C, H, W), dtype=jnp.float32)
    p1 = make_params(kp1, C)
    out1 = jax.block_until_ready(se_fn(x1, *p1))
    ref1 = _reference(x1, *p1)
    assert out1.shape == (B, C, H, W)
    assert jnp.allclose(out1, ref1, atol=1e-5, rtol=1e-5), "mismatch (channels-first)"

    # ---- Test 2: channels-last path (HW = 49 not %128, C = 128 lane-dense) ----
    B2, C2, H2, W2 = 2, 128, 7, 7
    x2 = jax.random.normal(kx2, (B2, C2, H2, W2), dtype=jnp.float32)
    p2 = make_params(kp2, C2)
    out2 = jax.block_until_ready(se_fn(x2, *p2))
    ref2 = _reference(x2, *p2)
    assert out2.shape == (B2, C2, H2, W2)
    assert jnp.allclose(out2, ref2, atol=1e-4, rtol=1e-4), "mismatch (channels-last)"

    print("KERNEL_OK")
</pallas_src>

<mosaic_0001>
module attributes {stable_mosaic.version = 11 : i64} {
  func.func @_se_kernel(%arg0: i32, %arg1: memref<1x4x256xf32, #tpu.memory_space<vmem>>, %arg2: memref<4x1xf32, #tpu.memory_space<vmem>>, %arg3: memref<1x4xf32, #tpu.memory_space<vmem>>, %arg4: memref<2x4xf32, #tpu.memory_space<vmem>>, %arg5: memref<1x4x256xf32, #tpu.memory_space<vmem>>) attributes {dimension_semantics = [#tpu.dimension_semantics<parallel>], iteration_bounds = array<i64: 2>, scalar_prefetch = 0 : i64, scratch_operands = 0 : i64, tpu.core_type = #tpu.core_type<tc>, window_params = [{transform_indices = @transform_0, window_bounds = array<i64: 1, 4, 256>}, {pipeline_mode = #tpu.pipeline_mode<synchronous>, transform_indices = @transform_1, window_bounds = array<i64: 4, 1>}, {pipeline_mode = #tpu.pipeline_mode<synchronous>, transform_indices = @transform_2, window_bounds = array<i64: 1, 4>}, {pipeline_mode = #tpu.pipeline_mode<synchronous>, transform_indices = @transform_3, window_bounds = array<i64: 2, 4>}, {transform_indices = @transform_4, window_bounds = array<i64: 1, 4, 256>}]} {
    %c0 = arith.constant 0 : index
    %c0_0 = arith.constant 0 : index
    %c0_1 = arith.constant 0 : index
    %0 = vector.load %arg1[%c0, %c0_0, %c0_1] : memref<1x4x256xf32, #tpu.memory_space<vmem>>, vector<1x4x256xf32>
    %cst = arith.constant dense<0.000000e+00> : vector<1x4xf32>
    %1 = vector.multi_reduction <add>, %0, %cst [2] : vector<1x4x256xf32> to vector<1x4xf32>
    %cst_2 = arith.constant 3.906250e-03 : f32
    %2 = vector.broadcast %cst_2 : f32 to vector<1x4xf32>
    %3 = arith.mulf %1, %2 : vector<1x4xf32>
    %c0_3 = arith.constant 0 : index
    %c0_4 = arith.constant 0 : index
    %4 = vector.load %arg4[%c0_3, %c0_4] : memref<2x4xf32, #tpu.memory_space<vmem>>, vector<1x1xf32>
    %c1 = arith.constant 1 : index
    %c0_5 = arith.constant 0 : index
    %5 = vector.load %arg4[%c1, %c0_5] : memref<2x4xf32, #tpu.memory_space<vmem>>, vector<1x4xf32>
    %c0_6 = arith.constant 0 : index
    %c0_7 = arith.constant 0 : index
    %6 = vector.load %arg2[%c0_6, %c0_7] : memref<4x1xf32, #tpu.memory_space<vmem>>, vector<4x1xf32>
    %cst_8 = arith.constant dense<0.000000e+00> : vector<1x1xf32>
    %7 = tpu.matmul %3, %6, %cst_8 {dimension_numbers = #tpu.dot_dimension_numbers<[1], [0], [0], [1], [0, 0, 1, 1], [], []>} : vector<1x4xf32>, vector<4x1xf32>, vector<1x1xf32> -> vector<1x1xf32>
    %8 = arith.addf %7, %4 : vector<1x1xf32>
    %cst_9 = arith.constant 0.000000e+00 : f32
    %9 = vector.broadcast %cst_9 : f32 to vector<1x1xf32>
    %10 = arith.maximumf %8, %9 : vector<1x1xf32>
    %c0_10 = arith.constant 0 : index
    %c0_11 = arith.constant 0 : index
    %11 = vector.load %arg3[%c0_10, %c0_11] : memref<1x4xf32, #tpu.memory_space<vmem>>, vector<1x4xf32>
    %cst_12 = arith.constant dense<0.000000e+00> : vector<1x4xf32>
    %12 = tpu.matmul %10, %11, %cst_12 {dimension_numbers = #tpu.dot_dimension_numbers<[1], [0], [0], [1], [0, 0, 1, 1], [], []>} : vector<1x1xf32>, vector<1x4xf32>, vector<1x4xf32> -> vector<1x4xf32>
    %13 = arith.addf %12, %5 : vector<1x4xf32>
    %cst_13 = arith.constant 0.000000e+00 : f32
    %cst_14 = arith.constant 1.000000e+00 : f32
    %14 = vector.broadcast %cst_13 : f32 to vector<1x4xf32>
    %15 = arith.maximumf %14, %13 : vector<1x4xf32>
    %16 = vector.broadcast %cst_14 : f32 to vector<1x4xf32>
    %17 = arith.minimumf %16, %15 : vector<1x4xf32>
    %18 = vector.shape_cast %17 : vector<1x4xf32> to vector<1x4x1xf32>
    %19 = vector.broadcast %18 : vector<1x4x1xf32> to vector<1x4x256xf32>
    %20 = arith.mulf %0, %19 : vector<1x4x256xf32>
    %c0_15 = arith.constant 0 : index
    %c0_16 = arith.constant 0 : index
    %c0_17 = arith.constant 0 : index
    %21 = vector.load %arg5[%c0_15, %c0_16, %c0_17] : memref<1x4x256xf32, #tpu.memory_space<vmem>>, vector<1x4x256xf32>
    tpu.vector_store %arg5[%c0_15, %c0_16, %c0_17], %20 {strides = array<i32>} : memref<1x4x256xf32, #tpu.memory_space<vmem>>, vector<1x4x256xf32>,
    return
  }
  func.func @transform_0(%arg0: i32) -> (i32, i32, i32) {
    %c0_i32 = arith.constant 0 : i32
    %c0_i32_0 = arith.constant 0 : i32
    %c0_i32_1 = arith.constant 0 : i32
    return %arg0, %c0_i32, %c0_i32_0 : i32, i32, i32
  }
  func.func @transform_1(%arg0: i32) -> (i32, i32) {
    %c0_i32 = arith.constant 0 : i32
    %c0_i32_0 = arith.constant 0 : i32
    %c0_i32_1 = arith.constant 0 : i32
    return %c0_i32, %c0_i32_0 : i32, i32
  }
  func.func @transform_2(%arg0: i32) -> (i32, i32) {
    %c0_i32 = arith.constant 0 : i32
    %c0_i32_0 = arith.constant 0 : i32
    %c0_i32_1 = arith.constant 0 : i32
    return %c0_i32, %c0_i32_0 : i32, i32
  }
  func.func @transform_3(%arg0: i32) -> (i32, i32) {
    %c0_i32 = arith.constant 0 : i32
    %c0_i32_0 = arith.constant 0 : i32
    %c0_i32_1 = arith.constant 0 : i32
    return %c0_i32, %c0_i32_0 : i32, i32
  }
  func.func @transform_4(%arg0: i32) -> (i32, i32, i32) {
    %c0_i32 = arith.constant 0 : i32
    %c0_i32_0 = arith.constant 0 : i32
    %c0_i32_1 = arith.constant 0 : i32
    return %arg0, %c0_i32, %c0_i32_0 : i32, i32, i32
  }
}

</mosaic_0001>

<llo_original>
// kernel: se_layer.1
$region0: #{se_layer.1}
  #allocation0 [shape = 'u32[]', space=smem, size = 0x4, offset = 0x4, fixed_abs, tag = 'smem constant byte address 0x4 - core index']
  #allocation1 [shape = 'u32[144,128]{1,0:T(1,128)}', space=vmem, size = 0x12000, scoped, tag = 'internal scratch']
  %s0 = inlined_call_operand.hbm [shape: f32[2,4,256], index: 0, kind: input, shape index: {}]
  %s1 = inlined_call_operand.hbm [shape: f32[4,1], index: 1, kind: input, shape index: {}]
  %s2 = inlined_call_operand.hbm [shape: f32[1,4], index: 2, kind: input, shape index: {}]
  %s3 = inlined_call_operand.hbm [shape: f32[2,4], index: 3, kind: input, shape index: {}]
  %s4 = inlined_call_operand.hbm [shape: f32[2,4,256], index: 4, kind: output, shape index: {}]
  %s5 = sld [smem:[#allocation0]]
  $region65: #{se_layer.1} parent=0
    _
  %s7 = ssub.s32 1, %s5
  %s8 = scalar_select 0, %s7, %s5
  $region1: #{se_layer.1} parent=0
    #allocation2 [shape = 'u8[8192]{0}', space=vmem, size = 0x2000, scoped, tag = 'input window, operand 0']
    #allocation3 [shape = 's32[2]{0}', space=sflag, size = 0x8, scoped, tag = 'scoped memory for se_layer.1']
    #allocation4 [shape = 's32[2]{0}', space=sflag, size = 0x8, scoped, tag = 'scoped memory for se_layer.1']
    #allocation5 [shape = 'u8[2048]{0}', space=vmem, size = 0x800, scoped, tag = 'input window, operand 1, single buffered']
    #allocation6 [shape = 's32[1]{0}', space=sflag, size = 0x4, scoped, tag = 'scoped memory for se_layer.1']
    #allocation7 [shape = 'u8[512]{0}', space=vmem, size = 0x400, scoped, tag = 'input window, operand 2, single buffered']
    #allocation8 [shape = 'u8[1024]{0}', space=vmem, size = 0x400, scoped, tag = 'input window, operand 3, single buffered']
    #allocation9 [shape = 's32[1]{0}', space=sflag, size = 0x4, scoped, tag = 'scoped memory for se_layer.1']
    #allocation10 [shape = 'u8[8192]{0}', space=vmem, size = 0x2000, scoped, tag = 'output window, operand 0']
    %9 = vsyncpa [#allocation3], 0
    %s10 = scalar_lea.sflag [#allocation3], 1
    %11 = vsyncpa %s10, 0
    %12 = vsyncpa [#allocation6], 0
    %13 = vsyncpa [#allocation9], 0
    %14 = vsyncpa [#allocation4], 0
    %s15 = scalar_lea.sflag [#allocation4], 1
    %16 = vsyncpa %s15, 0
    loop: start=0, step=1, limit=4
    $region2: #{se_layer.1} parent=1 // loop_pre_header
      _
    $region3: #{se_layer.1} parent=1 // loop_header
      %s18 = sphi 0, %s22
      %p19 = scmp.ge.s32.totalorder %s18, 4
      %s28 = sphi 0, %s30
      %s31 = sphi 0, %s28
      %s32 = sphi 0, %s31
      %s48 = sphi 0, %s32
      %s52 = sphi 0, %s52
      %s54 = sphi 0, %s52
      %s55 = sphi 0, %s54
      %s69 = sphi 0, %s55
      %s73 = sphi 0, %s73
      %s75 = sphi 0, %s73
      %s76 = sphi 0, %s75
      %s90 = sphi 0, %s76
      %s94 = sphi 0, %s94
      %s96 = sphi 0, %s94
      %s97 = sphi 0, %s96
      %s111 = sphi 0, %s97
      %s117 = sphi 0, %s119
      %s120 = sphi 0, %s117
      %s121 = sphi 0, %s120
      %s137 = sphi 0, %s121
    $region4: #{se_layer.1} parent=1 // loop_header_branch
      %21 = sbr.rel (%p19) target = $region8
    $region5: #{se_layer.1} parent=1 // loop_body
      %s23 = ssub.s32 %s18, 1
      %s24 = ssub.s32 %s18, 2
      %s25 = sadd.s32 %s18, 1
      %s26 = ssub.s32 %s18, %s25
      %p27 = scmp.eq.s32.totalorder %s26, 0
      %s29 = sadd.s32 %s28, 1
      %s30 = scalar_select %p27, %s28, %s29
      %p33 = pneg %p27
      %p34 = scmp.eq.s32.totalorder %s18, 1
      %p35 = por %p33, %p34
      %p36 = scmp.ne.s32.totalorder %s28, %s31
      %p37 = scmp.eq.s32.totalorder %s18, 0
      %p38 = por %p36, %p37
      %p39 = scmp.ne.s32.totalorder %s28, %s31
      %p40 = scmp.eq.s32.totalorder %s23, 1
      %p41 = por %p39, %p40
      %p42 = scmp.ne.s32.totalorder %s31, %s32
      %p43 = scmp.eq.s32.totalorder %s23, 0
      %p44 = por %p42, %p43
      %p45 = scmp.ne.s32.totalorder %s31, %s32
      %p46 = scmp.eq.s32.totalorder %s24, 1
      %p47 = por %p45, %p46
      %p49 = scmp.ne.s32.totalorder %s32, %s48
      %p50 = scmp.eq.s32.totalorder %s24, 0
      %p51 = por %p49, %p50
      %s53 = sadd.s32 %s52, 1
      %p56 = scmp.eq.s32.totalorder %s18, 1
      %p57 = scmp.ne.s32.totalorder %s52, %s54
      %p58 = scmp.eq.s32.totalorder %s18, 0
      %p59 = por %p57, %p58
      %p60 = scmp.ne.s32.totalorder %s52, %s54
      %p61 = scmp.eq.s32.totalorder %s23, 1
      %p62 = por %p60, %p61
      %p63 = scmp.ne.s32.totalorder %s54, %s55
      %p64 = scmp.eq.s32.totalorder %s23, 0
      %p65 = por %p63, %p64
      %p66 = scmp.ne.s32.totalorder %s54, %s55
      %p67 = scmp.eq.s32.totalorder %s24, 1
      %p68 = por %p66, %p67
      %p70 = scmp.ne.s32.totalorder %s55, %s69
      %p71 = scmp.eq.s32.totalorder %s24, 0
      %p72 = por %p70, %p71
      %s74 = sadd.s32 %s73, 1
      %p77 = scmp.eq.s32.totalorder %s18, 1
      %p78 = scmp.ne.s32.totalorder %s73, %s75
      %p79 = scmp.eq.s32.totalorder %s18, 0
      %p80 = por %p78, %p79
      %p81 = scmp.ne.s32.totalorder %s73, %s75
      %p82 = scmp.eq.s32.totalorder %s23, 1
      %p83 = por %p81, %p82
      %p84 = scmp.ne.s32.totalorder %s75, %s76
      %p85 = scmp.eq.s32.totalorder %s23, 0
      %p86 = por %p84, %p85
      %p87 = scmp.ne.s32.totalorder %s75, %s76
      %p88 = scmp.eq.s32.totalorder %s24, 1
      %p89 = por %p87, %p88
      %p91 = scmp.ne.s32.totalorder %s76, %s90
      %p92 = scmp.eq.s32.totalorder %s24, 0
      %p93 = por %p91, %p92
      %s95 = sadd.s32 %s94, 1
      %p98 = scmp.eq.s32.totalorder %s18, 1
      %p99 = scmp.ne.s32.totalorder %s94, %s96
      %p100 = scmp.eq.s32.totalorder %s18, 0
      %p101 = por %p99, %p100
      %p102 = scmp.ne.s32.totalorder %s94, %s96
      %p103 = scmp.eq.s32.totalorder %s23, 1
      %p104 = por %p102, %p103
      %p105 = scmp.ne.s32.totalorder %s96, %s97
      %p106 = scmp.eq.s32.totalorder %s23, 0
      %p107 = por %p105, %p106
      %p108 = scmp.ne.s32.totalorder %s96, %s97
      %p109 = scmp.eq.s32.totalorder %s24, 1
      %p110 = por %p108, %p109
      %p112 = scmp.ne.s32.totalorder %s97, %s111
      %p113 = scmp.eq.s32.totalorder %s24, 0
      %p114 = por %p112, %p113
      %s115 = ssub.s32 %s18, %s25
      %p116 = scmp.eq.s32.totalorder %s115, 0
      %s118 = sadd.s32 %s117, 1
      %s119 = scalar_select %p116, %s117, %s118
      %p122 = pneg %p116
      %p123 = scmp.eq.s32.totalorder %s18, 1
      %p124 = por %p122, %p123
      %p125 = scmp.ne.s32.totalorder %s117, %s120
      %p126 = scmp.eq.s32.totalorder %s18, 0
      %p127 = por %p125, %p126
      %p128 = scmp.ne.s32.totalorder %s117, %s120
      %p129 = scmp.eq.s32.totalorder %s23, 1
      %p130 = por %p128, %p129
      %p131 = scmp.ne.s32.totalorder %s120, %s121
      %p132 = scmp.eq.s32.totalorder %s23, 0
      %p133 = por %p131, %p132
      %p134 = scmp.ne.s32.totalorder %s120, %s121
      %p135 = scmp.eq.s32.totalorder %s24, 1
      %p136 = por %p134, %p135
      %p138 = scmp.ne.s32.totalorder %s121, %s137
      %p139 = scmp.eq.s32.totalorder %s24, 0
      %p140 = por %p138, %p139
      %p141 = scmp.le.s32.totalorder 1, %s18
      %p142 = scmp.lt.s32.totalorder %s18, 3
      %p143 = pnand %p141, %p142
      %p144 = pneg %p143
      // Predicated region
      $region9: #{se_layer.1} parent=5 // pred_check
        _
      $region10: #{se_layer.1} parent=5 // pred_check_branch
        %146 = sbr.rel (%p143) target = $region12
      $region11: #{se_layer.1} parent=5 // pred_region
        %s147 = ssub.s32 %s18, 1
        // Predicated region
        $region13: #{se_layer.1} parent=11 // pred_check
          %p148 = pneg %p65
        $region14: #{se_layer.1} parent=11 // pred_check_branch
          %150 = sbr.rel (%p148) target = $region16
        $region15: #{se_layer.1} parent=11 // pred_region
          %s152 = ssub.s32 64, 64
          %153 = vsyncadd [#allocation6], %s152
          %s155 = sshll.u32 [#allocation5], 4
          %s156 = int_to_ptr.vmem [resolvable:$true] %s155
          %158 = dma.hbm_to_vmem [thread:$0]  %s1, 64, %s156, [#allocation6]
        $region16: #{se_layer.1} parent=11 // pred_fallthru
          _
        // Predicated region
        $region17: #{se_layer.1} parent=11 // pred_check
          %p159 = pneg %p86
        $region18: #{se_layer.1} parent=11 // pred_check_branch
          %161 = sbr.rel (%p159) target = $region20
        $region19: #{se_layer.1} parent=11 // pred_region
          %s163 = ssub.s32 16, 16
          %164 = vsyncadd [#allocation6], %s163
          %s166 = sshll.u32 [#allocation7], 4
          %s167 = int_to_ptr.vmem [resolvable:$true] %s166
          %169 = dma.hbm_to_vmem [thread:$0]  %s2, 16, %s167, [#allocation6]
        $region20: #{se_layer.1} parent=11 // pred_fallthru
          _
        // Predicated region
        $region21: #{se_layer.1} parent=11 // pred_check
          %p170 = pneg %p107
        $region22: #{se_layer.1} parent=11 // pred_check_branch
          %172 = sbr.rel (%p170) target = $region24
        $region23: #{se_layer.1} parent=11 // pred_region
          %s174 = ssub.s32 32, 32
          %175 = vsyncadd [#allocation9], %s174
          %s177 = sshll.u32 [#allocation8], 4
          %s178 = int_to_ptr.vmem [resolvable:$true] %s177
          %180 = dma.hbm_to_vmem [thread:$0]  %s3, 32, %s178, [#allocation9]
        $region24: #{se_layer.1} parent=11 // pred_fallthru
          _
      $region12: #{se_layer.1} parent=5 // pred_fallthru
        _
      %p181 = scmp.lt.s32.totalorder %s18, 2
      // Predicated region
      $region25: #{se_layer.1} parent=5 // pred_check
        %p182 = pneg %p181
      $region26: #{se_layer.1} parent=5 // pred_check_branch
        %184 = sbr.rel (%p182) target = $region28
      $region27: #{se_layer.1} parent=5 // pred_region
        // Predicated region
        $region29: #{se_layer.1} parent=27 // pred_check
          %p185 = pneg %p38
        $region30: #{se_layer.1} parent=27 // pred_check_branch
          %187 = sbr.rel (%p185) target = $region32
        $region31: #{se_layer.1} parent=27 // pred_region
          %s188 = sand.u32 %s28, 1
          %s189 = scalar_lea.sflag [#allocation3], %s188
          %s190 = sand.u32 %s28, 1
          %s191 = smul.addr %s190, 8
          %s192 = scalar_lea.vmem [#allocation2], %s191
          %s194 = ssub.s32 128, 128
          %195 = vsyncadd %s189, %s194
          %s196 = smul.addr %s18, 2
          %s197 = smul.addr %s196, 64
          %s198 = scalar_lea.hbm %s0, %s197
          %s200 = sshll.u32 %s192, 4
          %s201 = int_to_ptr.vmem [resolvable:$true] %s200
          %203 = dma.hbm_to_vmem [thread:$0]  %s198, 128, %s201, %s189
        $region32: #{se_layer.1} parent=27 // pred_fallthru
          _
      $region28: #{se_layer.1} parent=5 // pred_fallthru
        _
      %p204 = scmp.le.s32.totalorder 1, %s18
      %p205 = scmp.lt.s32.totalorder %s18, 3
      %p206 = pnand %p204, %p205
      %p207 = pneg %p206
      // Predicated region
      $region33: #{se_layer.1} parent=5 // pred_check
        _
      $region34: #{se_layer.1} parent=5 // pred_check_branch
        %209 = sbr.rel (%p206) target = $region36
      $region35: #{se_layer.1} parent=5 // pred_region
        %s210 = ssub.s32 %s18, 1
        %s211 = sand.u32 %s31, 1
        %s212 = scalar_lea.sflag [#allocation3], %s211
        %s213 = sand.u32 %s31, 1
        %s214 = smul.addr %s213, 8
        %s215 = scalar_lea.vmem [#allocation2], %s214
        // Predicated region
        $region37: #{se_layer.1} parent=35 // pred_check
          %p216 = pneg %p44
        $region38: #{se_layer.1} parent=35 // pred_check_branch
          %218 = sbr.rel (%p216) target = $region40
        $region39: #{se_layer.1} parent=35 // pred_region
          %219 = dma.done %s212, 128
        $region40: #{se_layer.1} parent=35 // pred_fallthru
          _
        // Predicated region
        $region41: #{se_layer.1} parent=35 // pred_check
          %p220 = pneg %p65
        $region42: #{se_layer.1} parent=35 // pred_check_branch
          %222 = sbr.rel (%p220) target = $region44
        $region43: #{se_layer.1} parent=35 // pred_region
          %223 = dma.done [#allocation6], 64
        $region44: #{se_layer.1} parent=35 // pred_fallthru
          _
        // Predicated region
        $region45: #{se_layer.1} parent=35 // pred_check
          %p224 = pneg %p86
        $region46: #{se_layer.1} parent=35 // pred_check_branch
          %226 = sbr.rel (%p224) target = $region48
        $region47: #{se_layer.1} parent=35 // pred_region
          %227 = dma.done [#allocation6], 16
        $region48: #{se_layer.1} parent=35 // pred_fallthru
          _
        // Predicated region
        $region49: #{se_layer.1} parent=35 // pred_check
          %p228 = pneg %p107
        $region50: #{se_layer.1} parent=35 // pred_check_branch
          %230 = sbr.rel (%p228) target = $region52
        $region51: #{se_layer.1} parent=35 // pred_region
          %231 = dma.done [#allocation9], 32
        $region52: #{se_layer.1} parent=35 // pred_fallthru
          _
        %s232 = sand.u32 %s31, 1
        %s233 = scalar_lea.sflag [#allocation3], %s232
        %s234 = sand.u32 %s31, 1
        %s235 = smul.addr %s234, 8
        %s236 = scalar_lea.vmem [#allocation2], %s235
        %p237 = pneg %p44
        %p238 = pneg %p41
        %p239 = pneg %p65
        %p240 = pneg %p62
        %p241 = pneg %p86
        %p242 = pneg %p83
        %p243 = pneg %p107
        %p244 = pneg %p104
        %p245 = pneg %p133
        %p246 = pneg %p130
        %s247 = sand.u32 %s120, 1
        %s248 = scalar_lea.sflag [#allocation4], %s247
        %s249 = sand.u32 %s120, 1
        %s250 = smul.addr %s249, 8
        %s251 = scalar_lea.vmem [#allocation10], %s250
        %v252 = vld [vmem:[%s215] sm:$0xff]
        %v254 = vcombine.high %v252, %v252
        %vm256 = vcmask 1043456
        %v257 = vsel %vm256, %v252, 0.0
        %v258 = vsel %vm256, %v254, 0.0
        %v259 = vadd.f32 %v257, %v258
        %260 = vadd.xlane.f32.xlu0 %v259
        %v261 = vpop.xlane.xlu0 %260
        %v262 = vmul.f32 %v261, 0.00390625
        %v263 = vld [vmem:[#allocation8] sm:$0x1]
        %v264 = vld [vmem:[#allocation8 + $0x1] sm:$0x1]
        %v265 = vld [vmem:[#allocation5] sm:$0xf]
        %v267 = vlaneseq
        %v268 = vand.u32 %v267, 127
        %v269 = vlaneseq
        %v270 = vshrl.u32 %v269, 7
        %v271 = vsub.s32 %v268, %v270
        %v272 = vrot.slane %v262, %v271
        %vm273 = vcmask 31744
        %v274 = vsel %vm273, %v272, 0
        %v277 = vsel %vm256, %v265, 0
        %279 = vmatprep.subr.mxu0 0.0
        %280 = vmatpush1.msra.mxu0 %v277
        %281 = vmatprep.subr.mxu0 0.0
        %282 = vmatpush1.msra.mxu0 0.0
        %283 = vmatprep.subr.mxu0 0.0
        %284 = vmatpush1.msra.mxu0 0.0
        %285 = vmatprep.subr.mxu0 0.0
        %286 = vmatpush1.msra.mxu0 0.0
        %287 = vmatprep.subr.mxu0 0.0
        %288 = vmatpush1.msra.mxu0 0.0
        %289 = vmatprep.subr.mxu0 0.0
        %290 = vmatpush1.msra.mxu0 0.0
        %291 = vmatprep.subr.mxu0 0.0
        %292 = vmatpush1.msra.mxu0 0.0
        %293 = vmatprep.subr.mxu0 0.0
        %294 = vmatpush1.msra.mxu0 0.0
        %295 = vmatprep.subr.mxu0 0.0
        %296 = vmatpush1.msra.mxu0 0.0
        %297 = vmatprep.subr.mxu0 0.0
        %298 = vmatpush1.msra.mxu0 0.0
        %299 = vmatprep.subr.mxu0 0.0
        %300 = vmatpush1.msra.mxu0 0.0
        %301 = vmatprep.subr.mxu0 0.0
        %302 = vmatpush1.msra.mxu0 0.0
        %303 = vmatprep.subr.mxu0 0.0
        %304 = vmatpush1.msra.mxu0 0.0
        %305 = vmatprep.subr.mxu0 0.0
        %306 = vmatpush1.msra.mxu0 0.0
        %307 = vmatprep.subr.mxu0 0.0
        %308 = vmatpush1.msra.mxu0 0.0
        %309 = vmatprep.subr.mxu0 0.0
        %310 = vmatpush1.msra.mxu0 0.0
        %311 = vmatprep.subr.mxu0 0.0
        %312 = vmatpush1.msra.mxu0 0.0
        %313 = vmatprep.subr.mxu0 0.0
        %314 = vmatpush1.msra.mxu0 0.0
        %315 = vmatprep.subr.mxu0 0.0
        %316 = vmatpush1.msra.mxu0 0.0
        %317 = vmatprep.subr.mxu0 0.0
        %318 = vmatpush1.msra.mxu0 0.0
        %319 = vmatprep.subr.mxu0 0.0
        %320 = vmatpush1.msra.mxu0 0.0
        %321 = vmatprep.subr.mxu0 0.0
        %322 = vmatpush1.msra.mxu0 0.0
        %323 = vmatprep.subr.mxu0 0.0
        %324 = vmatpush1.msra.mxu0 0.0
        %325 = vmatprep.subr.mxu0 0.0
        %326 = vmatpush1.msra.mxu0 0.0
        %327 = vmatprep.subr.mxu0 0.0
        %328 = vmatpush1.msra.mxu0 0.0
        %329 = vmatprep.subr.mxu0 0.0
        %330 = vmatpush1.msra.mxu0 0.0
        %331 = vmatprep.subr.mxu0 0.0
        %332 = vmatpush1.msra.mxu0 0.0
        %333 = vmatprep.subr.mxu0 0.0
        %334 = vmatpush1.msra.mxu0 0.0
        %335 = vmatprep.subr.mxu0 0.0
        %336 = vmatpush1.msra.mxu0 0.0
        %337 = vmatprep.subr.mxu0 0.0
        %338 = vmatpush1.msra.mxu0 0.0
        %339 = vmatprep.subr.mxu0 0.0
        %340 = vmatpush1.msra.mxu0 0.0
        %341 = vmatprep.subr.mxu0 0.0
        %342 = vmatpush1.msra.mxu0 0.0
        %343 = vmatprep.mubr.f32.mxu0 0.0
        %344 = vmatmul.mubr.f32.gmra.mrb[0].mxu0 %v274
        %v345 = vpop.f32.mrb[0].mxu0
        %v346 = vadd.f32 %v263, %v345
        %v347 = vpop.f32.mrb[0].mxu0
        %348 = vdwg.mxu0
        %v349 = vmax.f32 %v346, 0.0
        %v350 = vld [vmem:[#allocation7] sm:$0x1]
        %vm351 = vcmask 7168
        %v353 = vsel %vm351, %v349, 0
        %vm355 = vcmask 1040384
        %v357 = vsel %vm355, %v350, 0
        %359 = vmatprep.subr.mxu0 0.0
        %360 = vmatpush1.msra.mxu0 %v357
        %361 = vmatprep.subr.mxu0 0.0
        %362 = vmatpush1.msra.mxu0 0.0
        %363 = vmatprep.subr.mxu0 0.0
        %364 = vmatpush1.msra.mxu0 0.0
        %365 = vmatprep.subr.mxu0 0.0
        %366 = vmatpush1.msra.mxu0 0.0
        %367 = vmatprep.subr.mxu0 0.0
        %368 = vmatpush1.msra.mxu0 0.0
        %369 = vmatprep.subr.mxu0 0.0
        %370 = vmatpush1.msra.mxu0 0.0
        %371 = vmatprep.subr.mxu0 0.0
        %372 = vmatpush1.msra.mxu0 0.0
        %373 = vmatprep.subr.mxu0 0.0
        %374 = vmatpush1.msra.mxu0 0.0
        %375 = vmatprep.subr.mxu0 0.0
        %376 = vmatpush1.msra.mxu0 0.0
        %377 = vmatprep.subr.mxu0 0.0
        %378 = vmatpush1.msra.mxu0 0.0
        %379 = vmatprep.subr.mxu0 0.0
        %380 = vmatpush1.msra.mxu0 0.0
        %381 = vmatprep.subr.mxu0 0.0
        %382 = vmatpush1.msra.mxu0 0.0
        %383 = vmatprep.subr.mxu0 0.0
        %384 = vmatpush1.msra.mxu0 0.0
        %385 = vmatprep.subr.mxu0 0.0
        %386 = vmatpush1.msra.mxu0 0.0
        %387 = vmatprep.subr.mxu0 0.0
        %388 = vmatpush1.msra.mxu0 0.0
        %389 = vmatprep.subr.mxu0 0.0
        %390 = vmatpush1.msra.mxu0 0.0
        %391 = vmatprep.subr.mxu0 0.0
        %392 = vmatpush1.msra.mxu0 0.0
        %393 = vmatprep.subr.mxu0 0.0
        %394 = vmatpush1.msra.mxu0 0.0
        %395 = vmatprep.subr.mxu0 0.0
        %396 = vmatpush1.msra.mxu0 0.0
        %397 = vmatprep.subr.mxu0 0.0
        %398 = vmatpush1.msra.mxu0 0.0
        %399 = vmatprep.subr.mxu0 0.0
        %400 = vmatpush1.msra.mxu0 0.0
        %401 = vmatprep.subr.mxu0 0.0
        %402 = vmatpush1.msra.mxu0 0.0
        %403 = vmatprep.subr.mxu0 0.0
        %404 = vmatpush1.msra.mxu0 0.0
        %405 = vmatprep.subr.mxu0 0.0
        %406 = vmatpush1.msra.mxu0 0.0
        %407 = vmatprep.subr.mxu0 0.0
        %408 = vmatpush1.msra.mxu0 0.0
        %409 = vmatprep.subr.mxu0 0.0
        %410 = vmatpush1.msra.mxu0 0.0
        %411 = vmatprep.subr.mxu0 0.0
        %412 = vmatpush1.msra.mxu0 0.0
        %413 = vmatprep.subr.mxu0 0.0
        %414 = vmatpush1.msra.mxu0 0.0
        %415 = vmatprep.subr.mxu0 0.0
        %416 = vmatpush1.msra.mxu0 0.0
        %417 = vmatprep.subr.mxu0 0.0
        %418 = vmatpush1.msra.mxu0 0.0
        %419 = vmatprep.subr.mxu0 0.0
        %420 = vmatpush1.msra.mxu0 0.0
        %421 = vmatprep.subr.mxu0 0.0
        %422 = vmatpush1.msra.mxu0 0.0
        %423 = vmatprep.mubr.f32.mxu0 0.0
        %424 = vmatmul.mubr.f32.gmra.mrb[0].mxu0 %v353
        %v425 = vpop.f32.mrb[0].mxu0
        %v426 = vadd.f32 %v264, %v425
        %v427 = vpop.f32.mrb[0].mxu0
        %428 = vdwg.mxu0
        %v429 = vmax.f32 %v426, 0.0
        %v430 = vmin.f32 %v429, 1.0
        %v431 = vlaneseq
        %v432 = vshrl.u32 %v431, 7
        %v433 = vsub.s32 0, %v432
        %v434 = vrot.slane %v430, %v433
        %436 = vbcast.lane.b32.xlu0 %v434, 256
        %v437 = vpop.permute.xlu0 %436
        %v440 = vunpack.c.l.s4 839922192
        %v441 = vunpack.c.0.s8 %v440
        %v442 = vlaneseq
        %v443 = vshrl.u32 %v442, 7
        %v444 = vsub.s32 %v441, %v443
        %v445 = vrot.slane %v437, %v444
        %v447 = vmul.f32 %v252, %v445
        %448 = vst [vmem:[%s251] sm:$0xff] %v447
        %s449 = sand.u32 %s120, 1
        %s450 = scalar_lea.sflag [#allocation4], %s449
        %s451 = sand.u32 %s120, 1
        %s452 = smul.addr %s451, 8
        %s453 = scalar_lea.vmem [#allocation10], %s452
        // Predicated region
        $region53: #{se_layer.1} parent=35 // pred_check
          %p454 = pneg %p130
        $region54: #{se_layer.1} parent=35 // pred_check_branch
          %456 = sbr.rel (%p454) target = $region56
        $region55: #{se_layer.1} parent=35 // pred_region
          %s458 = ssub.s32 128, 128
          %459 = vsyncadd %s450, %s458
          %s460 = smul.addr %s23, 2
          %s461 = smul.addr %s460, 64
          %s462 = scalar_lea.hbm %s4, %s461
          %s464 = sshll.u32 %s453, 4
          %s465 = int_to_ptr.vmem [resolvable:$true] %s464
          %467 = dma.vmem_to_hbm [thread:$0]  %s465, 128, %s462, %s450
        $region56: #{se_layer.1} parent=35 // pred_fallthru
          _
      $region36: #{se_layer.1} parent=5 // pred_fallthru
        _
      %p468 = scmp.le.s32.totalorder 2, %s18
      // Predicated region
      $region57: #{se_layer.1} parent=5 // pred_check
        %p469 = pneg %p468
      $region58: #{se_layer.1} parent=5 // pred_check_branch
        %471 = sbr.rel (%p469) target = $region60
      $region59: #{se_layer.1} parent=5 // pred_region
        %s472 = ssub.s32 %s18, 2
        // Predicated region
        $region61: #{se_layer.1} parent=59 // pred_check
          %p473 = pneg %p136
        $region62: #{se_layer.1} parent=59 // pred_check_branch
          %475 = sbr.rel (%p473) target = $region64
        $region63: #{se_layer.1} parent=59 // pred_region
          %s476 = sand.u32 %s121, 1
          %s477 = scalar_lea.sflag [#allocation4], %s476
          %s478 = sand.u32 %s121, 1
          %s479 = smul.addr %s478, 8
          %s480 = scalar_lea.vmem [#allocation10], %s479
          %481 = dma.done %s477, 128
        $region64: #{se_layer.1} parent=59 // pred_fallthru
          _
      $region60: #{se_layer.1} parent=5 // pred_fallthru
        _
    $region6: #{se_layer.1} parent=1 // loop_footer
      %s22 = sadd.s32 1, %s18
    $region7: #{se_layer.1} parent=1 // loop_footer_branch
      %17 = sbr.rel target = $region3
    $region8: #{se_layer.1} parent=1 // loop_exit
      _
    %482 = vsyncpa [#allocation3], 1
    %s483 = scalar_lea.sflag [#allocation3], 1
    %484 = vsyncpa %s483, 1
    %485 = vsyncpa [#allocation6], 1
    %486 = vsyncpa [#allocation9], 1
    %487 = vsyncpa [#allocation4], 1
    %s488 = scalar_lea.sflag [#allocation4], 1
    %489 = vsyncpa %s488, 1

</llo_original>
